<compile_context>
chip_gen: v6e
topology: v6e:2x2x1
jax: 0.10.0
libtpu: 0.0.40
codegen_flags: <defaults>
</compile_context>

<pallas_src>
import functools

import jax
import jax.numpy as jnp
from jax import lax
from jax.experimental import pallas as pl
from jax.experimental.pallas import tpu as pltpu


def get_binary_kernel2d(window_size, dtype=jnp.float32):
    """Deterministic (kh*kw, 1, kh, kw) one-hot patch-extraction kernel
    (parity with the PyTorch helper; the Pallas kernel extracts shifted
    windows directly, so this is not on the hot path)."""
    if isinstance(window_size, int):
        ky = kx = window_size
    else:
        ky, kx = window_size
    n = ky * kx
    return jnp.eye(n, dtype=dtype).reshape(n, 1, ky, kx)


# ---------------------------------------------------------------------------
# Median selection helpers (pure jnp.minimum / jnp.maximum -> VPU only).
# ---------------------------------------------------------------------------
def _med3(a, b, c):
    mn = jnp.minimum(a, b)
    mx = jnp.maximum(a, b)
    return jnp.maximum(mn, jnp.minimum(mx, c))


def _min_med_max3(a, b, c):
    mn = jnp.minimum(a, b)
    mx = jnp.maximum(a, b)
    lo = jnp.minimum(mn, c)
    hi = jnp.maximum(mx, c)
    me = jnp.maximum(mn, jnp.minimum(mx, c))
    return lo, me, hi


def _median_select(patches):
    """Median over a list of equally shaped arrays (general odd-count path)."""
    n = len(patches)
    if n == 1:
        return patches[0]
    # TODO(synk): for windows > 3x3 replace the full odd-even transposition
    # sort with a pruning median-selection network (e.g. 99-op median-of-25)
    # to bound vreg liveness; only 3x3 is on the fast path.
    p = list(patches)
    for rnd in range(n):
        for i in range(rnd % 2, n - 1, 2):
            lo = jnp.minimum(p[i], p[i + 1])
            hi = jnp.maximum(p[i], p[i + 1])
            p[i], p[i + 1] = lo, hi
    return p[(n - 1) // 2]   # lower median == unique median for odd n


# ---------------------------------------------------------------------------
# Kernel
# ---------------------------------------------------------------------------
def _median_blur_kernel(col_ref, x_ref, o_ref, *, kh, kw, h, w, hw_pad):
    """One (bc_tile, hw_pad) slab of flattened images per grid step.

    col_ref: (1, hw_pad) int32   hoisted column index (flat_idx % w)
    x_ref:   (bct, hw_pad)       input images, flattened row-major (lane-dense)
    o_ref:   (bct, hw_pad)       median-filtered output
    """
    x = x_ref[...]
    col = col_ref[...]
    idx = lax.broadcasted_iota(jnp.int32, col.shape, 1)   # (1, hw_pad) flat idx
    hw = h * w
    zero = jnp.zeros((), x.dtype)

    def _roll(v, s):
        """out[i] = v[(i + s) mod hw_pad] -- XLU lane rotation, free-ish."""
        shift = (-s) % hw_pad
        return v if shift == 0 else pltpu.roll(v, shift=shift, axis=1)

    def shifted(s, ok):
        p = _roll(x, s)
        return p if ok is None else jnp.where(ok, p, zero)

    if kh == 3 and kw == 3:
        # ---- fast path: shared per-row stats + vertical combine ------------
        L = shifted(-1, col >= 1)           # left neighbour (0 at col == 0)
        R = shifted(+1, col <= w - 2)       # right neighbour (0 at col == w-1)
        lo, me, hi = _min_med_max3(L, x, R)
        del L, R

        # Row-validity masks, broadcast once (jnp does not CSE broadcast_in_dim).
        up_ok = jnp.broadcast_to(idx >= w, x.shape)        # row r-1 exists
        down_ok = jnp.broadcast_to(idx < hw - w, x.shape)  # row r+1 exists

        def vshift(v, oy, ok):
            # Row stats of image row r+oy; zero (== stats of a padding row)
            # where that row falls outside the image.
            return jnp.where(ok, _roll(v, oy * w), zero)

        a = jnp.maximum(lo, vshift(lo, -1, up_ok))          # max of row-minima
        a = jnp.maximum(a, vshift(lo, +1, down_ok))
        c = jnp.minimum(hi, vshift(hi, -1, up_ok))          # min of row-maxima
        c = jnp.minimum(c, vshift(hi, +1, down_ok))
        b = _med3(vshift(me, -1, up_ok), me, vshift(me, +1, down_ok))
        med = _med3(a, b, c)
    else:
        # ---- general odd window: per-tap roll + combined mask --------------
        ph, pw = (kh - 1) // 2, (kw - 1) // 2
        patches = []
        for oy in range(-ph, ph + 1):
            if oy < 0:
                row_ok = idx >= (-oy) * w
            elif oy > 0:
                row_ok = idx < hw - oy * w
            else:
                row_ok = None
            for ox in range(-pw, pw + 1):
                if ox < 0:
                    c_ok = col >= -ox
                elif ox > 0:
                    c_ok = col <= (w - 1 - ox)
                else:
                    c_ok = None
                if row_ok is None:
                    ok = c_ok
                elif c_ok is None:
                    ok = row_ok
                else:
                    ok = jnp.logical_and(row_ok, c_ok)
                patches.append(shifted(oy * w + ox, ok))
        med = _median_select(patches)

    o_ref[...] = med.astype(o_ref.dtype)


# ---------------------------------------------------------------------------
# Wrapper
# ---------------------------------------------------------------------------
def _pick_bc_tile(bc, hw_pad, dtype):
    """Images (rows) per grid step: target ~2 MiB blocks (amortise the fixed
    ~0.35 us per-step cost / hit the HBM roofline) with dtype-aware sublane
    rounding; keep >= 2 blocks for v7x megacore when there is enough work."""
    itemsize = jnp.dtype(dtype).itemsize
    sub = max(8, 32 // itemsize)            # 8 (f32) / 16 (bf16) / 32 (int8)
    row_bytes = hw_pad * itemsize
    target_bytes = 2 * 1024 * 1024
    t = max(1, target_bytes // row_bytes)
    if t >= bc:
        if bc >= 2 * sub and bc * row_bytes >= 2 * target_bytes:
            half = -(-bc // 2)
            return (-(-half // sub)) * sub, sub
        return bc, sub
    return max(sub, (t // sub) * sub), sub


def median_blur(x, kernel_size=(3, 3)):
    """Pallas implementation of MedianBlur.forward.  x: (B, C, H, W)."""
    if isinstance(kernel_size, int):
        kernel_size = (kernel_size, kernel_size)
    kh, kw = kernel_size
    assert kh % 2 == 1 and kw % 2 == 1, "MedianBlur requires odd kernel sizes"
    b, c, h, w = x.shape
    bc, hw = b * c, h * w

    # Flatten each image to one lane-dense row (metadata-only reshape); pad the
    # lane dim to a multiple of 128 only when needed so stores are unmasked.
    hw_pad = ((hw + 127) // 128) * 128
    xf = x.reshape(bc, hw)
    if hw_pad != hw:
        xf = jnp.pad(xf, ((0, 0), (0, hw_pad - hw)))

    bc_tile, _ = _pick_bc_tile(bc, hw_pad, x.dtype)
    n_blocks = pl.cdiv(bc, bc_tile)
    bc_pad = n_blocks * bc_tile
    if bc_pad != bc:
        xf = jnp.pad(xf, ((0, bc_pad - bc), (0, 0)))   # batch axis only: cheap

    # Hoisted column-index row (no per-step block-scale iota + mod in-kernel).
    col_idx = (jnp.arange(hw_pad, dtype=jnp.int32) % jnp.int32(w)).reshape(1, hw_pad)

    kernel = functools.partial(_median_blur_kernel, kh=kh, kw=kw, h=h, w=w,
                               hw_pad=hw_pad)

    itemsize = x.dtype.itemsize
    block_bytes = bc_tile * hw_pad * itemsize
    # Cover 2x in + 2x out blocks plus live selection intermediates on every
    # generation (v5e default scoped VMEM is 16 MiB); stay under v7x's 64 MiB.
    vmem_limit = int(min(48 << 20, max(32 << 20, 12 * block_bytes)))
    # TODO(synk): very large images (whole-image rows no longer fitting the
    # VMEM budget, roughly > ~700x700 f32 per image, ~2x smaller on v7x) need
    # an H-tiled halo plan instead of whole-image flattened rows.

    n_taps = kh * kw
    ops_per_elem = 40 if n_taps == 9 else n_taps * n_taps + 2 * n_taps
    cost = pl.CostEstimate(
        flops=int(bc_pad) * int(hw_pad) * int(ops_per_elem),
        transcendentals=0,
        bytes_accessed=int(2 * bc_pad * hw_pad * itemsize + 4 * hw_pad),
    )

    out = pl.pallas_call(
        kernel,
        out_shape=jax.ShapeDtypeStruct((bc_pad, hw_pad), x.dtype),
        grid=(n_blocks,),
        in_specs=[
            pl.BlockSpec((1, hw_pad), lambda i: (0, 0)),        # column index
            pl.BlockSpec((bc_tile, hw_pad), lambda i: (i, 0)),  # images
        ],
        out_specs=pl.BlockSpec((bc_tile, hw_pad), lambda i: (i, 0)),
        compiler_params=pltpu.CompilerParams(
            dimension_semantics=("parallel",),
            vmem_limit_bytes=vmem_limit),
        cost_estimate=cost,
    )(col_idx, xf)

    if bc_pad != bc or hw_pad != hw:
        out = out[:bc, :hw]
    return out.reshape(b, c, h, w)


def _median_blur_ref(x, kernel_size=(3, 3)):
    """Pure-JAX reference mirroring the PyTorch forward (zero pad + lower median)."""
    b, c, h, w = x.shape
    kh, kw = kernel_size
    ph, pw = (kh - 1) // 2, (kw - 1) // 2
    xp = jnp.pad(x, ((0, 0), (0, 0), (ph, ph), (pw, pw)))
    feats = jnp.stack(
        [xp[:, :, dy:dy + h, dx:dx + w] for dy in range(kh) for dx in range(kw)],
        axis=2,
    )  # (B, C, kh*kw, H, W)
    m = (kh * kw - 1) // 2
    return jnp.sort(feats, axis=2)[:, :, m]


if __name__ == "__main__":
    key = jax.random.PRNGKey(0)
    _ = get_binary_kernel2d((3, 3))   # parity with the PyTorch module's weight

    # Main check: 3x3 fast path on (2, 4, 16, 16).
    x = jax.random.uniform(key, (2, 4, 16, 16), dtype=jnp.float32)
    out = jax.block_until_ready(median_blur(x, (3, 3)))
    ref = _median_blur_ref(x, (3, 3))
    assert out.shape == x.shape and out.dtype == x.dtype
    assert jnp.allclose(out, ref, atol=1e-6), "3x3 mismatch vs reference"

    # Secondary check: general path + lane padding (H*W not a multiple of 128).
    x2 = jax.random.uniform(jax.random.PRNGKey(0), (1, 3, 7, 9), dtype=jnp.float32)
    out2 = jax.block_until_ready(median_blur(x2, (5, 5)))
    ref2 = _median_blur_ref(x2, (5, 5))
    assert jnp.allclose(out2, ref2, atol=1e-6), "5x5 mismatch vs reference"

    print("KERNEL_OK")
</pallas_src>

<mosaic_0001>
module attributes {stable_mosaic.version = 11 : i64} {
  func.func @_median_blur_kernel(%arg0: i32, %arg1: memref<1x256xi32, #tpu.memory_space<vmem>>, %arg2: memref<8x256xf32, #tpu.memory_space<vmem>>, %arg3: memref<8x256xf32, #tpu.memory_space<vmem>>) attributes {dimension_semantics = [#tpu.dimension_semantics<parallel>], iteration_bounds = array<i64: 1>, scalar_prefetch = 0 : i64, scratch_operands = 0 : i64, tpu.core_type = #tpu.core_type<tc>, window_params = [{pipeline_mode = #tpu.pipeline_mode<synchronous>, transform_indices = @transform_0, window_bounds = array<i64: 1, 256>}, {transform_indices = @transform_1, window_bounds = array<i64: 8, 256>}, {transform_indices = @transform_2, window_bounds = array<i64: 8, 256>}]} {
    %c0 = arith.constant 0 : index
    %c0_0 = arith.constant 0 : index
    %0 = vector.load %arg2[%c0, %c0_0] : memref<8x256xf32, #tpu.memory_space<vmem>>, vector<8x256xf32>
    %c0_1 = arith.constant 0 : index
    %c0_2 = arith.constant 0 : index
    %1 = vector.load %arg1[%c0_1, %c0_2] : memref<1x256xi32, #tpu.memory_space<vmem>>, vector<1x256xi32>
    %2 = tpu.iota {dimensions = array<i32: 1>} : vector<1x256xi32>
    %c1_i32 = arith.constant 1 : i32
    %3 = vector.broadcast %c1_i32 : i32 to vector<1x256xi32>
    %4 = arith.cmpi sge, %1, %3 : vector<1x256xi32>
    %c1_i32_3 = arith.constant 1 : i32
    %5 = tpu.dynamic_rotate %0 by %c1_i32_3 dim 1 : vector<8x256xf32>, i32 -> vector<8x256xf32>
    %cst = arith.constant 0.000000e+00 : f32
    %6 = vector.shape_cast %4 : vector<1x256xi1> to vector<1x256xi1>
    %7 = vector.broadcast %6 : vector<1x256xi1> to vector<8x256xi1>
    %8 = vector.broadcast %cst : f32 to vector<8x256xf32>
    %9 = arith.select %7, %5, %8 : vector<8x256xi1>, vector<8x256xf32>
    %c14_i32 = arith.constant 14 : i32
    %10 = vector.broadcast %c14_i32 : i32 to vector<1x256xi32>
    %11 = arith.cmpi sle, %1, %10 : vector<1x256xi32>
    %c255_i32 = arith.constant 255 : i32
    %12 = tpu.dynamic_rotate %0 by %c255_i32 dim 1 : vector<8x256xf32>, i32 -> vector<8x256xf32>
    %cst_4 = arith.constant 0.000000e+00 : f32
    %13 = vector.shape_cast %11 : vector<1x256xi1> to vector<1x256xi1>
    %14 = vector.broadcast %13 : vector<1x256xi1> to vector<8x256xi1>
    %15 = vector.broadcast %cst_4 : f32 to vector<8x256xf32>
    %16 = arith.select %14, %12, %15 : vector<8x256xi1>, vector<8x256xf32>
    %17 = arith.minimumf %9, %0 : vector<8x256xf32>
    %18 = arith.maximumf %9, %0 : vector<8x256xf32>
    %19 = arith.minimumf %17, %16 : vector<8x256xf32>
    %20 = arith.maximumf %18, %16 : vector<8x256xf32>
    %21 = arith.minimumf %18, %16 : vector<8x256xf32>
    %22 = arith.maximumf %17, %21 : vector<8x256xf32>
    %c16_i32 = arith.constant 16 : i32
    %23 = vector.broadcast %c16_i32 : i32 to vector<1x256xi32>
    %24 = arith.cmpi sge, %2, %23 : vector<1x256xi32>
    %25 = vector.shape_cast %24 : vector<1x256xi1> to vector<1x256xi1>
    %26 = vector.broadcast %25 : vector<1x256xi1> to vector<8x256xi1>
    %c240_i32 = arith.constant 240 : i32
    %27 = vector.broadcast %c240_i32 : i32 to vector<1x256xi32>
    %28 = arith.cmpi slt, %2, %27 : vector<1x256xi32>
    %29 = vector.shape_cast %28 : vector<1x256xi1> to vector<1x256xi1>
    %30 = vector.broadcast %29 : vector<1x256xi1> to vector<8x256xi1>
    %c16_i32_5 = arith.constant 16 : i32
    %31 = tpu.dynamic_rotate %19 by %c16_i32_5 dim 1 : vector<8x256xf32>, i32 -> vector<8x256xf32>
    %cst_6 = arith.constant 0.000000e+00 : f32
    %32 = vector.broadcast %cst_6 : f32 to vector<8x256xf32>
    %33 = arith.select %26, %31, %32 : vector<8x256xi1>, vector<8x256xf32>
    %34 = arith.maximumf %19, %33 : vector<8x256xf32>
    %c240_i32_7 = arith.constant 240 : i32
    %35 = tpu.dynamic_rotate %19 by %c240_i32_7 dim 1 : vector<8x256xf32>, i32 -> vector<8x256xf32>
    %cst_8 = arith.constant 0.000000e+00 : f32
    %36 = vector.broadcast %cst_8 : f32 to vector<8x256xf32>
    %37 = arith.select %30, %35, %36 : vector<8x256xi1>, vector<8x256xf32>
    %38 = arith.maximumf %34, %37 : vector<8x256xf32>
    %c16_i32_9 = arith.constant 16 : i32
    %39 = tpu.dynamic_rotate %20 by %c16_i32_9 dim 1 : vector<8x256xf32>, i32 -> vector<8x256xf32>
    %cst_10 = arith.constant 0.000000e+00 : f32
    %40 = vector.broadcast %cst_10 : f32 to vector<8x256xf32>
    %41 = arith.select %26, %39, %40 : vector<8x256xi1>, vector<8x256xf32>
    %42 = arith.minimumf %20, %41 : vector<8x256xf32>
    %c240_i32_11 = arith.constant 240 : i32
    %43 = tpu.dynamic_rotate %20 by %c240_i32_11 dim 1 : vector<8x256xf32>, i32 -> vector<8x256xf32>
    %cst_12 = arith.constant 0.000000e+00 : f32
    %44 = vector.broadcast %cst_12 : f32 to vector<8x256xf32>
    %45 = arith.select %30, %43, %44 : vector<8x256xi1>, vector<8x256xf32>
    %46 = arith.minimumf %42, %45 : vector<8x256xf32>
    %c16_i32_13 = arith.constant 16 : i32
    %47 = tpu.dynamic_rotate %22 by %c16_i32_13 dim 1 : vector<8x256xf32>, i32 -> vector<8x256xf32>
    %cst_14 = arith.constant 0.000000e+00 : f32
    %48 = vector.broadcast %cst_14 : f32 to vector<8x256xf32>
    %49 = arith.select %26, %47, %48 : vector<8x256xi1>, vector<8x256xf32>
    %c240_i32_15 = arith.constant 240 : i32
    %50 = tpu.dynamic_rotate %22 by %c240_i32_15 dim 1 : vector<8x256xf32>, i32 -> vector<8x256xf32>
    %cst_16 = arith.constant 0.000000e+00 : f32
    %51 = vector.broadcast %cst_16 : f32 to vector<8x256xf32>
    %52 = arith.select %30, %50, %51 : vector<8x256xi1>, vector<8x256xf32>
    %53 = arith.minimumf %49, %22 : vector<8x256xf32>
    %54 = arith.maximumf %49, %22 : vector<8x256xf32>
    %55 = arith.minimumf %54, %52 : vector<8x256xf32>
    %56 = arith.maximumf %53, %55 : vector<8x256xf32>
    %57 = arith.minimumf %38, %56 : vector<8x256xf32>
    %58 = arith.maximumf %38, %56 : vector<8x256xf32>
    %59 = arith.minimumf %58, %46 : vector<8x256xf32>
    %60 = arith.maximumf %57, %59 : vector<8x256xf32>
    %c0_17 = arith.constant 0 : index
    %c0_18 = arith.constant 0 : index
    %61 = vector.load %arg3[%c0_17, %c0_18] : memref<8x256xf32, #tpu.memory_space<vmem>>, vector<8x256xf32>
    tpu.vector_store %arg3[%c0_17, %c0_18], %60 {strides = array<i32>} : memref<8x256xf32, #tpu.memory_space<vmem>>, vector<8x256xf32>,
    return
  }
  func.func @transform_0(%arg0: i32) -> (i32, i32) {
    %c0_i32 = arith.constant 0 : i32
    %c0_i32_0 = arith.constant 0 : i32
    %c0_i32_1 = arith.constant 0 : i32
    return %c0_i32, %c0_i32_0 : i32, i32
  }
  func.func @transform_1(%arg0: i32) -> (i32, i32) {
    %c0_i32 = arith.constant 0 : i32
    %c0_i32_0 = arith.constant 0 : i32
    return %arg0, %c0_i32 : i32, i32
  }
  func.func @transform_2(%arg0: i32) -> (i32, i32) {
    %c0_i32 = arith.constant 0 : i32
    %c0_i32_0 = arith.constant 0 : i32
    return %arg0, %c0_i32 : i32, i32
  }
}

</mosaic_0001>

<llo_original>
// kernel: tpu_custom_call.1
$region0: #{tpu_custom_call.1}
  #allocation0 [shape = 'u32[]', space=smem, size = 0x4, offset = 0x4, fixed_abs, tag = 'smem constant byte address 0x4 - core index']
  #allocation1 [shape = 'u32[144,128]{1,0:T(1,128)}', space=vmem, size = 0x12000, scoped, tag = 'internal scratch']
  %s0 = inlined_call_operand.hbm [shape: s32[1,256], index: 0, kind: input, shape index: {}]
  %s1 = inlined_call_operand.hbm [shape: f32[8,256], index: 1, kind: input, shape index: {}]
  %s2 = inlined_call_operand.hbm [shape: f32[8,256], index: 2, kind: output, shape index: {}]
  %s3 = sld [smem:[#allocation0]]
  $region26: #{tpu_custom_call.1} parent=0
    _
  %s5 = ssub.s32 1, %s3
  %s6 = scalar_select 0, %s5, %s3
  $region1: #{tpu_custom_call.1} parent=0
    #allocation2 [shape = 'u8[1024]{0}', space=vmem, size = 0x400, scoped, tag = 'input window, operand 0, single buffered']
    #allocation3 [shape = 's32[1]{0}', space=sflag, size = 0x4, scoped, tag = 'scoped memory for tpu_custom_call.1']
    #allocation4 [shape = 's32[1]{0}', space=sflag, size = 0x4, scoped, tag = 'scoped memory for tpu_custom_call.1']
    #allocation5 [shape = 'u8[8192]{0}', space=vmem, size = 0x2000, scoped, tag = 'input window, operand 1, single buffered']
    #allocation6 [shape = 's32[1]{0}', space=sflag, size = 0x4, scoped, tag = 'scoped memory for tpu_custom_call.1']
    #allocation7 [shape = 'u8[8192]{0}', space=vmem, size = 0x2000, scoped, tag = 'output window, operand 0, single buffered']
    %7 = vsyncpa [#allocation3], 0
    %8 = vsyncpa [#allocation6], 0
    %9 = vsyncpa [#allocation4], 0
    // Predicated region
    $region2: #{tpu_custom_call.1} parent=1 // pred_check
      _
    $region3: #{tpu_custom_call.1} parent=1 // pred_check_branch
      %11 = sbr.rel (0) target = $region5
    $region4: #{tpu_custom_call.1} parent=1 // pred_region
      %s13 = ssub.s32 32, 32
      %14 = vsyncadd [#allocation3], %s13
      %s16 = sshll.u32 [#allocation2], 4
      %s17 = int_to_ptr.vmem [resolvable:$true] %s16
      %19 = dma.hbm_to_vmem [thread:$0]  %s0, 32, %s17, [#allocation3]
    $region5: #{tpu_custom_call.1} parent=1 // pred_fallthru
      _
    // Predicated region
    $region6: #{tpu_custom_call.1} parent=1 // pred_check
      _
    $region7: #{tpu_custom_call.1} parent=1 // pred_check_branch
      %21 = sbr.rel (0) target = $region9
    $region8: #{tpu_custom_call.1} parent=1 // pred_region
      %s23 = ssub.s32 256, 256
      %24 = vsyncadd [#allocation6], %s23
      %s26 = sshll.u32 [#allocation5], 4
      %s27 = int_to_ptr.vmem [resolvable:$true] %s26
      %29 = dma.hbm_to_vmem [thread:$0]  %s1, 256, %s27, [#allocation6]
    $region9: #{tpu_custom_call.1} parent=1 // pred_fallthru
      _
    // Predicated region
    $region10: #{tpu_custom_call.1} parent=1 // pred_check
      _
    $region11: #{tpu_custom_call.1} parent=1 // pred_check_branch
      %31 = sbr.rel (0) target = $region13
    $region12: #{tpu_custom_call.1} parent=1 // pred_region
      %32 = dma.done [#allocation3], 32
    $region13: #{tpu_custom_call.1} parent=1 // pred_fallthru
      _
    // Predicated region
    $region14: #{tpu_custom_call.1} parent=1 // pred_check
      _
    $region15: #{tpu_custom_call.1} parent=1 // pred_check_branch
      %34 = sbr.rel (0) target = $region17
    $region16: #{tpu_custom_call.1} parent=1 // pred_region
      %35 = dma.done [#allocation6], 256
    $region17: #{tpu_custom_call.1} parent=1 // pred_fallthru
      _
    %v36 = vld [vmem:[#allocation5] sm:$0xff]
    %v37 = vld [vmem:[#allocation5 + $0x8] sm:$0xff]
    %v38 = vld [vmem:[#allocation2] sm:$0x3]
    %v39 = vlaneseq
    %v40 = vand.u32 %v39, 127
    %v41 = vadd.s32 %v40, 128
    %vm42 = vcmp.ge.s32.totalorder %v38, 1
    %43 = vrot.lane.b32.xlu0 %v36, 1
    %v44 = vpop.permute.xlu0 %43
    %45 = vrot.lane.b32.xlu0 %v37, 1
    %v46 = vpop.permute.xlu0 %45
    %vm47 = vcmp.lt.s32.totalorder %v40, 1
    %v48 = vsel %vm47, %v44, %v46
    %v49 = vsel %vm47, %v46, %v44
    %v50 = vsel %vm42, 1, 0
    %v51 = vlaneseq
    %v52 = vshrl.u32 %v51, 7
    %v53 = vsub.s32 0, %v52
    %v54 = vrot.slane %v50, %v53
    %v55 = vlaneseq
    %v56 = vshrl.u32 %v55, 7
    %v57 = vsub.s32 1, %v56
    %v58 = vrot.slane %v50, %v57
    %vm59 = vcmp.eq.s32.totalorder %v54, 1
    %vm60 = vcmp.eq.s32.totalorder %v58, 1
    %v61 = vsel %vm59, %v49, 0.0
    %v62 = vsel %vm60, %v48, 0.0
    %vm63 = vcmp.le.s32.totalorder %v38, 14
    %64 = vrot.lane.b32.xlu0 %v36, 127
    %v65 = vpop.permute.xlu0 %64
    %66 = vrot.lane.b32.xlu0 %v37, 127
    %v67 = vpop.permute.xlu0 %66
    %vm68 = vcmp.lt.s32.totalorder %v40, 127
    %v69 = vsel %vm68, %v65, %v67
    %v70 = vsel %vm68, %v67, %v65
    %v71 = vsel %vm63, 1, 0
    %v72 = vlaneseq
    %v73 = vshrl.u32 %v72, 7
    %v74 = vsub.s32 0, %v73
    %v75 = vrot.slane %v71, %v74
    %v76 = vlaneseq
    %v77 = vshrl.u32 %v76, 7
    %v78 = vsub.s32 1, %v77
    %v79 = vrot.slane %v71, %v78
    %vm80 = vcmp.eq.s32.totalorder %v75, 1
    %vm81 = vcmp.eq.s32.totalorder %v79, 1
    %v82 = vsel %vm80, %v69, 0.0
    %v83 = vsel %vm81, %v70, 0.0
    %v84 = vmin.f32 %v61, %v36
    %v85 = vmin.f32 %v62, %v37
    %v86 = vmax.f32 %v61, %v36
    %v87 = vmax.f32 %v62, %v37
    %v88 = vmin.f32 %v84, %v82
    %v89 = vmin.f32 %v85, %v83
    %v90 = vmax.f32 %v86, %v82
    %v91 = vmax.f32 %v87, %v83
    %v92 = vmin.f32 %v86, %v82
    %v93 = vmin.f32 %v87, %v83
    %v94 = vmax.f32 %v84, %v92
    %v95 = vmax.f32 %v85, %v93
    %vm96 = vcmp.ge.s32.totalorder %v40, 16
    %vm97 = vcmp.ge.s32.totalorder %v41, 16
    %v98 = vsel %vm96, 1, 0
    %v99 = vsel %vm97, 1, 0
    %vm100 = vcmp.eq.s32.totalorder %v98, 1
    %vm101 = vcmp.eq.s32.totalorder %v99, 1
    %vm102 = vcmp.lt.s32.totalorder %v40, 240
    %vm103 = vcmp.lt.s32.totalorder %v41, 240
    %v104 = vsel %vm102, 1, 0
    %v105 = vsel %vm103, 1, 0
    %vm106 = vcmp.eq.s32.totalorder %v104, 1
    %vm107 = vcmp.eq.s32.totalorder %v105, 1
    %108 = vrot.lane.b32.xlu0 %v88, 16
    %v109 = vpop.permute.xlu0 %108
    %110 = vrot.lane.b32.xlu0 %v89, 16
    %v111 = vpop.permute.xlu0 %110
    %vm112 = vcmp.lt.s32.totalorder %v40, 16
    %v113 = vsel %vm112, %v109, %v111
    %v114 = vsel %vm112, %v111, %v109
    %v115 = vsel %vm100, %v114, 0.0
    %v116 = vsel %vm101, %v113, 0.0
    %v117 = vmax.f32 %v88, %v115
    %v118 = vmax.f32 %v89, %v116
    %119 = vrot.lane.b32.xlu0 %v88, 112
    %v120 = vpop.permute.xlu0 %119
    %121 = vrot.lane.b32.xlu0 %v89, 112
    %v122 = vpop.permute.xlu0 %121
    %vm123 = vcmp.lt.s32.totalorder %v40, 112
    %v124 = vsel %vm123, %v120, %v122
    %v125 = vsel %vm123, %v122, %v120
    %v126 = vsel %vm106, %v124, 0.0
    %v127 = vsel %vm107, %v125, 0.0
    %v128 = vmax.f32 %v117, %v126
    %v129 = vmax.f32 %v118, %v127
    %130 = vrot.lane.b32.xlu0 %v90, 16
    %v131 = vpop.permute.xlu0 %130
    %132 = vrot.lane.b32.xlu0 %v91, 16
    %v133 = vpop.permute.xlu0 %132
    %v134 = vsel %vm112, %v131, %v133
    %v135 = vsel %vm112, %v133, %v131
    %v136 = vsel %vm100, %v135, 0.0
    %v137 = vsel %vm101, %v134, 0.0
    %v138 = vmin.f32 %v90, %v136
    %v139 = vmin.f32 %v91, %v137
    %140 = vrot.lane.b32.xlu0 %v90, 112
    %v141 = vpop.permute.xlu0 %140
    %142 = vrot.lane.b32.xlu0 %v91, 112
    %v143 = vpop.permute.xlu0 %142
    %v144 = vsel %vm123, %v141, %v143
    %v145 = vsel %vm123, %v143, %v141
    %v146 = vsel %vm106, %v144, 0.0
    %v147 = vsel %vm107, %v145, 0.0
    %v148 = vmin.f32 %v138, %v146
    %v149 = vmin.f32 %v139, %v147
    %150 = vrot.lane.b32.xlu0 %v94, 16
    %v151 = vpop.permute.xlu0 %150
    %152 = vrot.lane.b32.xlu0 %v95, 16
    %v153 = vpop.permute.xlu0 %152
    %v154 = vsel %vm112, %v151, %v153
    %v155 = vsel %vm112, %v153, %v151
    %v156 = vsel %vm100, %v155, 0.0
    %v157 = vsel %vm101, %v154, 0.0
    %158 = vrot.lane.b32.xlu0 %v94, 112
    %v159 = vpop.permute.xlu0 %158
    %160 = vrot.lane.b32.xlu0 %v95, 112
    %v161 = vpop.permute.xlu0 %160
    %v162 = vsel %vm123, %v159, %v161
    %v163 = vsel %vm123, %v161, %v159
    %v164 = vsel %vm106, %v162, 0.0
    %v165 = vsel %vm107, %v163, 0.0
    %v166 = vmin.f32 %v156, %v94
    %v167 = vmin.f32 %v157, %v95
    %v168 = vmax.f32 %v156, %v94
    %v169 = vmax.f32 %v157, %v95
    %v170 = vmin.f32 %v168, %v164
    %v171 = vmin.f32 %v169, %v165
    %v172 = vmax.f32 %v166, %v170
    %v173 = vmax.f32 %v167, %v171
    %v174 = vmin.f32 %v128, %v172
    %v175 = vmin.f32 %v129, %v173
    %v176 = vmax.f32 %v128, %v172
    %v177 = vmax.f32 %v129, %v173
    %v178 = vmin.f32 %v176, %v148
    %v179 = vmin.f32 %v177, %v149
    %v180 = vmax.f32 %v174, %v178
    %v181 = vmax.f32 %v175, %v179
    %182 = vst [vmem:[#allocation7] sm:$0xff] %v180
    %183 = vst [vmem:[#allocation7 + $0x8] sm:$0xff] %v181
    // Predicated region
    $region18: #{tpu_custom_call.1} parent=1 // pred_check
      _
    $region19: #{tpu_custom_call.1} parent=1 // pred_check_branch
      %185 = sbr.rel (0) target = $region21
    $region20: #{tpu_custom_call.1} parent=1 // pred_region
      %s187 = ssub.s32 256, 256
      %188 = vsyncadd [#allocation4], %s187
      %s190 = sshll.u32 [#allocation7], 4
      %s191 = int_to_ptr.vmem [resolvable:$true] %s190
      %193 = dma.vmem_to_hbm [thread:$0]  %s191, 256, %s2, [#allocation4]
    $region21: #{tpu_custom_call.1} parent=1 // pred_fallthru
      _
    // Predicated region
    $region22: #{tpu_custom_call.1} parent=1 // pred_check
      _
    $region23: #{tpu_custom_call.1} parent=1 // pred_check_branch
      %195 = sbr.rel (0) target = $region25
    $region24: #{tpu_custom_call.1} parent=1 // pred_region
      %196 = dma.done [#allocation4], 256
    $region25: #{tpu_custom_call.1} parent=1 // pred_fallthru
      _
    %197 = vsyncpa [#allocation3], 1
    %198 = vsyncpa [#allocation6], 1
    %199 = vsyncpa [#allocation4], 1

</llo_original>
